<compile_context>
chip_gen: v5e
topology: v5e:2x2
jax: 0.10.0
libtpu: 0.0.40
codegen_flags: <defaults>
</compile_context>

<pallas_src>
import functools

import jax
import jax.numpy as jnp
from jax.experimental import pallas as pl
from jax.experimental.pallas import tpu as pltpu

EPS = 1e-6


def tcn_block_kernel(x_ref, w1_ref, wdw_ref, w3_ref, pp_ref, al_ref, o_ref,
                     *, Bblk, T, Cin, Cmid, Cout, K, dilation, pad):
    # ---- unpack consolidated parameters (all loop-invariant, hoisted) ----
    pp = pp_ref[...]                      # (Cmax, 8) packed per-channel params
    b1 = pp[:Cmid, 0:1]                   # (Cmid, 1): broadcast over lanes (T)
    g1 = pp[:Cmid, 1:2]
    be1 = pp[:Cmid, 2:3]
    bdw = pp[:Cmid, 3:4]
    g2 = pp[:Cmid, 4:5]
    be2 = pp[:Cmid, 5:6]
    b3 = pp[:Cout, 6:7]
    a1 = al_ref[0]                        # shared PReLU alphas (SMEM scalars)
    a2 = al_ref[1]

    w1 = w1_ref[...]                      # (Cmid, Cin)  f32 or bf16 (wrapper-cast)
    w3 = w3_ref[...]                      # (Cout, Cmid) f32 or bf16
    wdw = wdw_ref[...]                    # (Cmid, K)    f32 depthwise taps
    wdw_cols = [wdw[:, k:k + 1] for k in range(K)]        # hoisted tap columns

    inv_n = 1.0 / float(Cmid * T)
    zpad = jnp.zeros((Cmid, pad), jnp.float32) if pad > 0 else None

    def gln(h, gamma, beta):
        # Fused-moment global layer norm: one pass for sum / sum-of-squares,
        # rsqrt on the EUP, gamma folded into scale, beta - mean*scale folded
        # into a per-channel shift -> exactly one mul + one add per element.
        s1 = jnp.sum(h)
        s2 = jnp.sum(h * h)
        mean = s1 * inv_n
        var = jnp.maximum(s2 * inv_n - mean * mean, 0.0)   # clamp: f32 cancellation
        scale = gamma * jax.lax.rsqrt(var + EPS)           # (C, 1)
        shift = beta - mean * scale                        # (C, 1)
        return h * scale + shift

    def one_sample(s):
        xs = x_ref[s]                                                   # (Cin, T)

        # ---- 1x1 conv (pointwise) + bias ----
        h = jnp.dot(w1, xs, preferred_element_type=jnp.float32) + b1    # (Cmid, T)
        # ---- PReLU (single shared alpha, PyTorch default) ----
        h = jnp.where(h >= 0, h, a1 * h)
        # ---- GlobalLayerNorm 1 ----
        h = gln(h, g1, be1)

        # ---- depthwise dilated conv, 'same' padding (value-level) ----
        hp = h if pad == 0 else jnp.concatenate([zpad, h, zpad], axis=1)
        acc = hp[:, 0:T] * wdw_cols[0] + bdw               # bias folded into tap 0
        for k in range(1, K):                              # K static & small
            kd = k * dilation
            acc = acc + hp[:, kd:kd + T] * wdw_cols[k]

        # ---- PReLU 2 ----
        h = jnp.where(acc >= 0, acc, a2 * acc)
        # ---- GlobalLayerNorm 2 ----
        h = gln(h, g2, be2)

        # ---- final 1x1 conv + bias ----
        out = jnp.dot(w3, h.astype(w3.dtype),
                      preferred_element_type=jnp.float32) + b3          # (Cout, T)
        o_ref[s] = out.astype(o_ref.dtype)

    if Bblk == 1:
        one_sample(0)
    else:
        # fori_loop (not a static Python loop) bounds live ranges: only one
        # sample's (Cmid, T) temporaries are resident at a time.
        def body(s, carry):
            one_sample(s)
            return carry
        jax.lax.fori_loop(0, Bblk, body, 0)


def _vmem_capacity_bytes():
    try:
        info = pltpu.get_tpu_info()
        cap = getattr(info, "vmem_capacity_bytes", None)
        if cap:
            return int(cap)
    except Exception:
        pass
    return 64 * 2 ** 20   # conservative fallback (v7x per-TC VMEM)


def _per_step_vmem_bytes(bb, *, Cin, Cmid, Cout, T, K, pad, in_bytes, w_bytes):
    # Double-buffered I/O blocks + weights + one in-flight sample's f32
    # intermediates (h, hp, acc, out, a couple of temps).
    blocks = 2 * bb * T * (Cin * in_bytes + Cout * 4)
    weights = 2 * ((Cmid * Cin + Cout * Cmid) * w_bytes
                   + Cmid * K * 4 + max(Cmid, Cout) * 8 * 4)
    live = 4 * (6 * Cmid * (T + 2 * pad) + (Cin + Cout) * T)
    return blocks + weights + live


def _pick_bblk(B, fits):
    # Pack several samples per grid step to amortize the ~0.35us per-step
    # overhead, keeping >= 2 grid steps when possible (megacore / v7x dual-TC)
    # and respecting the VMEM budget.
    for bb in (8, 4, 2, 1):
        if B % bb == 0 and B // bb >= 2 and fits(bb):
            return bb
    return 1


def regular_tcn_block(x, params, *, kernel_size, dilation,
                      matmul_dtype=jnp.float32):
    """x: (B, Cin, T) float32 (PyTorch NCW). Returns (B, Cout, T) float32.

    matmul_dtype=jnp.bfloat16 casts the 1x1-conv MXU operands (x, w1, w3) in
    the wrapper (halves input DMA bytes / input VMEM); accumulation and all
    elementwise / GLN / depthwise math stay f32. Valid on v5e/v6e/v7x.
    """
    B, Cin, T = x.shape
    K = kernel_size
    Cmid = params["w1"].shape[0]
    Cout = params["w3"].shape[0]
    pad = dilation * (K - 1) // 2
    assert dilation * (K - 1) % 2 == 0, "same-length output needs even dilation*(K-1)"

    use_bf16 = (matmul_dtype == jnp.bfloat16)
    mm_dtype = jnp.bfloat16 if use_bf16 else jnp.float32
    in_bytes = 2 if use_bf16 else 4
    Cmax = max(Cmid, Cout)

    # ---- VMEM-aware blocking / limit ----
    budget = int(0.8 * _vmem_capacity_bytes())
    per_step = functools.partial(
        _per_step_vmem_bytes, Cin=Cin, Cmid=Cmid, Cout=Cout, T=T, K=K,
        pad=pad, in_bytes=in_bytes, w_bytes=in_bytes)
    Bblk = _pick_bblk(B, lambda bb: per_step(bb) <= budget)
    nsteps = B // Bblk
    vmem_limit = int(min(budget, max(32 * 2 ** 20, 2 * per_step(Bblk))))

    # Consolidate the per-channel vectors into one (Cmax, 8) array
    # (columns broadcast over lanes in the channels-first kernel).
    pp = jnp.zeros((Cmax, 8), jnp.float32)
    pp = pp.at[:Cmid, 0].set(params["b1"].astype(jnp.float32))
    pp = pp.at[:Cmid, 1].set(params["gamma1"].astype(jnp.float32))
    pp = pp.at[:Cmid, 2].set(params["beta1"].astype(jnp.float32))
    pp = pp.at[:Cmid, 3].set(params["bdw"].astype(jnp.float32))
    pp = pp.at[:Cmid, 4].set(params["gamma2"].astype(jnp.float32))
    pp = pp.at[:Cmid, 5].set(params["beta2"].astype(jnp.float32))
    pp = pp.at[:Cout, 6].set(params["b3"].astype(jnp.float32))
    alphas = jnp.stack([jnp.asarray(params["a1"], jnp.float32).reshape(()),
                        jnp.asarray(params["a2"], jnp.float32).reshape(())])

    # MXU operands cast in the wrapper (no in-kernel convert pass, half the
    # input DMA bytes in the bf16 path). Depthwise taps stay f32 (VPU math).
    x = x.astype(mm_dtype)
    w1 = params["w1"].astype(mm_dtype)        # (Cmid, Cin)
    w3 = params["w3"].astype(mm_dtype)        # (Cout, Cmid)
    wdw = params["wdw"].astype(jnp.float32)   # (Cmid, K)

    kern = functools.partial(
        tcn_block_kernel, Bblk=Bblk, T=T, Cin=Cin, Cmid=Cmid, Cout=Cout,
        K=K, dilation=dilation, pad=pad)

    const2 = lambda i: (0, 0)
    out = pl.pallas_call(
        kern,
        out_shape=jax.ShapeDtypeStruct((B, Cout, T), jnp.float32),
        grid=(nsteps,),
        in_specs=[
            pl.BlockSpec((Bblk, Cin, T), lambda i: (i, 0, 0)),
            pl.BlockSpec((Cmid, Cin), const2),
            pl.BlockSpec((Cmid, K), const2),
            pl.BlockSpec((Cout, Cmid), const2),
            pl.BlockSpec((Cmax, 8), const2),
            pl.BlockSpec(memory_space=pltpu.MemorySpace.SMEM),   # PReLU alphas
        ],
        out_specs=pl.BlockSpec((Bblk, Cout, T), lambda i: (i, 0, 0)),
        compiler_params=pltpu.CompilerParams(
            dimension_semantics=("parallel",),
            vmem_limit_bytes=vmem_limit),
    )(x, w1, wdw, w3, pp, alphas)
    return out


def reference(x, params, *, kernel_size, dilation, matmul_dtype=jnp.float32):
    """Pure-JAX replica of the PyTorch forward (NCW layout)."""
    B, Cin, T = x.shape
    pad = dilation * (kernel_size - 1) // 2
    md = matmul_dtype

    def gln(h, g, b):
        mean = h.mean(axis=(1, 2), keepdims=True)
        var = ((h - mean) ** 2).mean(axis=(1, 2), keepdims=True)
        return g[None, :, None] * ((h - mean) / jnp.sqrt(var + EPS)) + b[None, :, None]

    h = jnp.einsum("bct,mc->bmt", x.astype(md), params["w1"].astype(md),
                   preferred_element_type=jnp.float32) + params["b1"][None, :, None]
    h = jnp.where(h >= 0, h, params["a1"] * h)
    h = gln(h, params["gamma1"], params["beta1"])

    hp = jnp.pad(h, ((0, 0), (0, 0), (pad, pad)))
    acc = jnp.zeros_like(h)
    for k in range(kernel_size):
        acc = acc + hp[:, :, k * dilation:k * dilation + T] * params["wdw"][None, :, k, None]
    h = acc + params["bdw"][None, :, None]

    h = jnp.where(h >= 0, h, params["a2"] * h)
    h = gln(h, params["gamma2"], params["beta2"])
    return jnp.einsum("bct,oc->bot", h.astype(md), params["w3"].astype(md),
                      preferred_element_type=jnp.float32) + params["b3"][None, :, None]


if __name__ == "__main__":
    key = jax.random.PRNGKey(0)
    B, Cin, Cmid, Cout, T = 4, 8, 16, 8, 16
    K, dilation_power = 3, 1
    dilation = 2 ** dilation_power

    ks = jax.random.split(key, 11)
    params = {
        "w1": 0.3 * jax.random.normal(ks[0], (Cmid, Cin), jnp.float32),
        "b1": 0.1 * jax.random.normal(ks[1], (Cmid,), jnp.float32),
        "a1": jnp.asarray(0.25, jnp.float32),          # nn.PReLU() default
        "gamma1": 1.0 + 0.1 * jax.random.normal(ks[2], (Cmid,), jnp.float32),
        "beta1": 0.1 * jax.random.normal(ks[3], (Cmid,), jnp.float32),
        "wdw": 0.3 * jax.random.normal(ks[4], (Cmid, K), jnp.float32),
        "bdw": 0.1 * jax.random.normal(ks[5], (Cmid,), jnp.float32),
        "a2": jnp.asarray(0.25, jnp.float32),
        "gamma2": 1.0 + 0.1 * jax.random.normal(ks[6], (Cmid,), jnp.float32),
        "beta2": 0.1 * jax.random.normal(ks[7], (Cmid,), jnp.float32),
        "w3": 0.3 * jax.random.normal(ks[8], (Cout, Cmid), jnp.float32),
        "b3": 0.1 * jax.random.normal(ks[9], (Cout,), jnp.float32),
    }
    x = jax.random.normal(ks[10], (B, Cin, T), jnp.float32)

    # f32 path: must match the PyTorch-faithful reference tightly.
    out = regular_tcn_block(x, params, kernel_size=K, dilation=dilation)
    out = jax.block_until_ready(out)
    ref = reference(x, params, kernel_size=K, dilation=dilation)
    assert out.shape == (B, Cout, T)
    err = float(jnp.max(jnp.abs(out - ref)))
    assert jnp.allclose(out, ref, atol=1e-4, rtol=1e-4), f"f32 max abs err {err}"

    # bf16-MXU-operand path (all generations): compare against a reference
    # that also feeds bf16 operands to the matmuls (f32 accumulate).
    out_bf = regular_tcn_block(x, params, kernel_size=K, dilation=dilation,
                               matmul_dtype=jnp.bfloat16)
    out_bf = jax.block_until_ready(out_bf)
    ref_bf = reference(x, params, kernel_size=K, dilation=dilation,
                       matmul_dtype=jnp.bfloat16)
    err_bf = float(jnp.max(jnp.abs(out_bf - ref_bf)))
    assert jnp.allclose(out_bf, ref_bf, atol=1e-2, rtol=1e-2), f"bf16 max abs err {err_bf}"

    print("KERNEL_OK")
</pallas_src>

<mosaic_0001>
module attributes {stable_mosaic.version = 11 : i64} {
  func.func @tcn_block_kernel(%arg0: i32, %arg1: memref<2x8x16xf32, #tpu.memory_space<vmem>>, %arg2: memref<16x8xf32, #tpu.memory_space<vmem>>, %arg3: memref<16x3xf32, #tpu.memory_space<vmem>>, %arg4: memref<8x16xf32, #tpu.memory_space<vmem>>, %arg5: memref<16x8xf32, #tpu.memory_space<vmem>>, %arg6: memref<2xf32, #tpu.memory_space<smem>>, %arg7: memref<2x8x16xf32, #tpu.memory_space<vmem>>) attributes {dimension_semantics = [#tpu.dimension_semantics<parallel>], iteration_bounds = array<i64: 2>, scalar_prefetch = 0 : i64, scratch_operands = 0 : i64, tpu.core_type = #tpu.core_type<tc>, window_params = [{transform_indices = @transform_0, window_bounds = array<i64: 2, 8, 16>}, {pipeline_mode = #tpu.pipeline_mode<synchronous>, transform_indices = @transform_1, window_bounds = array<i64: 16, 8>}, {pipeline_mode = #tpu.pipeline_mode<synchronous>, transform_indices = @transform_2, window_bounds = array<i64: 16, 3>}, {pipeline_mode = #tpu.pipeline_mode<synchronous>, transform_indices = @transform_3, window_bounds = array<i64: 8, 16>}, {pipeline_mode = #tpu.pipeline_mode<synchronous>, transform_indices = @transform_4, window_bounds = array<i64: 16, 8>}, {transform_indices = @transform_5, window_bounds = array<i64: 2>}, {transform_indices = @transform_6, window_bounds = array<i64: 2, 8, 16>}]} {
    %c0 = arith.constant 0 : index
    %c0_0 = arith.constant 0 : index
    %0 = vector.load %arg5[%c0, %c0_0] : memref<16x8xf32, #tpu.memory_space<vmem>>, vector<16x8xf32>
    %1 = vector.extract_strided_slice %0 {offsets = [0, 0], sizes = [16, 1], strides = [1, 1]} : vector<16x8xf32> to vector<16x1xf32>
    %2 = vector.extract_strided_slice %0 {offsets = [0, 1], sizes = [16, 1], strides = [1, 1]} : vector<16x8xf32> to vector<16x1xf32>
    %3 = vector.extract_strided_slice %0 {offsets = [0, 2], sizes = [16, 1], strides = [1, 1]} : vector<16x8xf32> to vector<16x1xf32>
    %4 = vector.extract_strided_slice %0 {offsets = [0, 3], sizes = [16, 1], strides = [1, 1]} : vector<16x8xf32> to vector<16x1xf32>
    %5 = vector.extract_strided_slice %0 {offsets = [0, 4], sizes = [16, 1], strides = [1, 1]} : vector<16x8xf32> to vector<16x1xf32>
    %6 = vector.extract_strided_slice %0 {offsets = [0, 5], sizes = [16, 1], strides = [1, 1]} : vector<16x8xf32> to vector<16x1xf32>
    %7 = vector.extract_strided_slice %0 {offsets = [0, 6], sizes = [8, 1], strides = [1, 1]} : vector<16x8xf32> to vector<8x1xf32>
    %c0_1 = arith.constant 0 : index
    %8 = memref.load %arg6[%c0_1] : memref<2xf32, #tpu.memory_space<smem>>
    %c1 = arith.constant 1 : index
    %9 = memref.load %arg6[%c1] : memref<2xf32, #tpu.memory_space<smem>>
    %c0_2 = arith.constant 0 : index
    %c0_3 = arith.constant 0 : index
    %10 = vector.load %arg2[%c0_2, %c0_3] : memref<16x8xf32, #tpu.memory_space<vmem>>, vector<16x8xf32>
    %c0_4 = arith.constant 0 : index
    %c0_5 = arith.constant 0 : index
    %11 = vector.load %arg4[%c0_4, %c0_5] : memref<8x16xf32, #tpu.memory_space<vmem>>, vector<8x16xf32>
    %c0_6 = arith.constant 0 : index
    %c0_7 = arith.constant 0 : index
    %12 = vector.load %arg3[%c0_6, %c0_7] : memref<16x3xf32, #tpu.memory_space<vmem>>, vector<16x3xf32>
    %13 = vector.extract_strided_slice %12 {offsets = [0, 0], sizes = [16, 1], strides = [1, 1]} : vector<16x3xf32> to vector<16x1xf32>
    %14 = vector.extract_strided_slice %12 {offsets = [0, 1], sizes = [16, 1], strides = [1, 1]} : vector<16x3xf32> to vector<16x1xf32>
    %15 = vector.extract_strided_slice %12 {offsets = [0, 2], sizes = [16, 1], strides = [1, 1]} : vector<16x3xf32> to vector<16x1xf32>
    %cst = arith.constant 0.000000e+00 : f32
    %16 = vector.broadcast %cst : f32 to vector<16x2xf32>
    %c0_i32 = arith.constant 0 : i32
    %c2_i32 = arith.constant 2 : i32
    %17 = arith.addi %c0_i32, %c2_i32 : i32
    %c1_i32 = arith.constant 1 : i32
    scf.for %arg8 = %c0_i32 to %17 step %c1_i32  : i32 {
      %18 = arith.index_cast %arg8 : i32 to index
      %c0_9 = arith.constant 0 : index
      %c0_10 = arith.constant 0 : index
      %19 = vector.load %arg1[%18, %c0_9, %c0_10] : memref<2x8x16xf32, #tpu.memory_space<vmem>>, vector<1x8x16xf32>
      %20 = vector.shape_cast %19 : vector<1x8x16xf32> to vector<8x16xf32>
      %cst_11 = arith.constant dense<0.000000e+00> : vector<16x16xf32>
      %21 = tpu.matmul %10, %20, %cst_11 {dimension_numbers = #tpu.dot_dimension_numbers<[1], [0], [0], [1], [0, 0, 1, 1], [], []>} : vector<16x8xf32>, vector<8x16xf32>, vector<16x16xf32> -> vector<16x16xf32>
      %22 = vector.broadcast %1 : vector<16x1xf32> to vector<16x16xf32>
      %23 = arith.addf %21, %22 : vector<16x16xf32>
      %cst_12 = arith.constant 0.000000e+00 : f32
      %24 = vector.broadcast %cst_12 : f32 to vector<16x16xf32>
      %25 = arith.cmpf oge, %23, %24 : vector<16x16xf32>
      %26 = vector.broadcast %8 : f32 to vector<16x16xf32>
      %27 = arith.mulf %26, %23 : vector<16x16xf32>
      %28 = arith.select %25, %23, %27 : vector<16x16xi1>, vector<16x16xf32>
      %29 = vector.shape_cast %28 : vector<16x16xf32> to vector<1x16x16xf32>
      %cst_13 = arith.constant dense<0.000000e+00> : vector<1xf32>
      %30 = vector.multi_reduction <add>, %29, %cst_13 [1, 2] : vector<1x16x16xf32> to vector<1xf32>
      %31 = vector.shape_cast %30 : vector<1xf32> to vector<1x1x1xf32>
      %32 = vector.extract %31[0, 0, 0] : f32 from vector<1x1x1xf32>
      %33 = arith.mulf %28, %28 : vector<16x16xf32>
      %34 = vector.shape_cast %33 : vector<16x16xf32> to vector<1x16x16xf32>
      %cst_14 = arith.constant dense<0.000000e+00> : vector<1xf32>
      %35 = vector.multi_reduction <add>, %34, %cst_14 [1, 2] : vector<1x16x16xf32> to vector<1xf32>
      %36 = vector.shape_cast %35 : vector<1xf32> to vector<1x1x1xf32>
      %37 = vector.extract %36[0, 0, 0] : f32 from vector<1x1x1xf32>
      %cst_15 = arith.constant 3.906250e-03 : f32
      %38 = arith.mulf %32, %cst_15 : f32
      %cst_16 = arith.constant 3.906250e-03 : f32
      %39 = arith.mulf %37, %cst_16 : f32
      %40 = arith.mulf %38, %38 : f32
      %41 = arith.subf %39, %40 : f32
      %cst_17 = arith.constant 0.000000e+00 : f32
      %42 = arith.maximumf %41, %cst_17 : f32
      %cst_18 = arith.constant 9.99999997E-7 : f32
      %43 = arith.addf %42, %cst_18 : f32
      %44 = math.rsqrt %43 : f32
      %45 = vector.broadcast %44 : f32 to vector<16x1xf32>
      %46 = arith.mulf %2, %45 : vector<16x1xf32>
      %47 = vector.broadcast %38 : f32 to vector<16x1xf32>
      %48 = arith.mulf %47, %46 : vector<16x1xf32>
      %49 = arith.subf %3, %48 : vector<16x1xf32>
      %50 = vector.broadcast %46 : vector<16x1xf32> to vector<16x16xf32>
      %51 = arith.mulf %28, %50 : vector<16x16xf32>
      %52 = vector.broadcast %49 : vector<16x1xf32> to vector<16x16xf32>
      %53 = arith.addf %51, %52 : vector<16x16xf32>
      %54 = tpu.concatenate %16, %53, %16 in 1 : vector<16x2xf32>, vector<16x16xf32>, vector<16x2xf32> -> vector<16x20xf32>
      %55 = vector.extract_strided_slice %54 {offsets = [0, 0], sizes = [16, 16], strides = [1, 1]} : vector<16x20xf32> to vector<16x16xf32>
      %56 = vector.broadcast %13 : vector<16x1xf32> to vector<16x16xf32>
      %57 = arith.mulf %55, %56 : vector<16x16xf32>
      %58 = vector.broadcast %4 : vector<16x1xf32> to vector<16x16xf32>
      %59 = arith.addf %57, %58 : vector<16x16xf32>
      %60 = vector.extract_strided_slice %54 {offsets = [0, 2], sizes = [16, 16], strides = [1, 1]} : vector<16x20xf32> to vector<16x16xf32>
      %61 = vector.broadcast %14 : vector<16x1xf32> to vector<16x16xf32>
      %62 = arith.mulf %60, %61 : vector<16x16xf32>
      %63 = arith.addf %59, %62 : vector<16x16xf32>
      %64 = vector.extract_strided_slice %54 {offsets = [0, 4], sizes = [16, 16], strides = [1, 1]} : vector<16x20xf32> to vector<16x16xf32>
      %65 = vector.broadcast %15 : vector<16x1xf32> to vector<16x16xf32>
      %66 = arith.mulf %64, %65 : vector<16x16xf32>
      %67 = arith.addf %63, %66 : vector<16x16xf32>
      %cst_19 = arith.constant 0.000000e+00 : f32
      %68 = vector.broadcast %cst_19 : f32 to vector<16x16xf32>
      %69 = arith.cmpf oge, %67, %68 : vector<16x16xf32>
      %70 = vector.broadcast %9 : f32 to vector<16x16xf32>
      %71 = arith.mulf %70, %67 : vector<16x16xf32>
      %72 = arith.select %69, %67, %71 : vector<16x16xi1>, vector<16x16xf32>
      %73 = vector.shape_cast %72 : vector<16x16xf32> to vector<1x16x16xf32>
      %cst_20 = arith.constant dense<0.000000e+00> : vector<1xf32>
      %74 = vector.multi_reduction <add>, %73, %cst_20 [1, 2] : vector<1x16x16xf32> to vector<1xf32>
      %75 = vector.shape_cast %74 : vector<1xf32> to vector<1x1x1xf32>
      %76 = vector.extract %75[0, 0, 0] : f32 from vector<1x1x1xf32>
      %77 = arith.mulf %72, %72 : vector<16x16xf32>
      %78 = vector.shape_cast %77 : vector<16x16xf32> to vector<1x16x16xf32>
      %cst_21 = arith.constant dense<0.000000e+00> : vector<1xf32>
      %79 = vector.multi_reduction <add>, %78, %cst_21 [1, 2] : vector<1x16x16xf32> to vector<1xf32>
      %80 = vector.shape_cast %79 : vector<1xf32> to vector<1x1x1xf32>
      %81 = vector.extract %80[0, 0, 0] : f32 from vector<1x1x1xf32>
      %cst_22 = arith.constant 3.906250e-03 : f32
      %82 = arith.mulf %76, %cst_22 : f32
      %cst_23 = arith.constant 3.906250e-03 : f32
      %83 = arith.mulf %81, %cst_23 : f32
      %84 = arith.mulf %82, %82 : f32
      %85 = arith.subf %83, %84 : f32
      %cst_24 = arith.constant 0.000000e+00 : f32
      %86 = arith.maximumf %85, %cst_24 : f32
      %cst_25 = arith.constant 9.99999997E-7 : f32
      %87 = arith.addf %86, %cst_25 : f32
      %88 = math.rsqrt %87 : f32
      %89 = vector.broadcast %88 : f32 to vector<16x1xf32>
      %90 = arith.mulf %5, %89 : vector<16x1xf32>
      %91 = vector.broadcast %82 : f32 to vector<16x1xf32>
      %92 = arith.mulf %91, %90 : vector<16x1xf32>
      %93 = arith.subf %6, %92 : vector<16x1xf32>
      %94 = vector.broadcast %90 : vector<16x1xf32> to vector<16x16xf32>
      %95 = arith.mulf %72, %94 : vector<16x16xf32>
      %96 = vector.broadcast %93 : vector<16x1xf32> to vector<16x16xf32>
      %97 = arith.addf %95, %96 : vector<16x16xf32>
      %cst_26 = arith.constant dense<0.000000e+00> : vector<8x16xf32>
      %98 = tpu.matmul %11, %97, %cst_26 {dimension_numbers = #tpu.dot_dimension_numbers<[1], [0], [0], [1], [0, 0, 1, 1], [], []>} : vector<8x16xf32>, vector<16x16xf32>, vector<8x16xf32> -> vector<8x16xf32>
      %99 = vector.broadcast %7 : vector<8x1xf32> to vector<8x16xf32>
      %100 = arith.addf %98, %99 : vector<8x16xf32>
      %101 = arith.index_cast %arg8 : i32 to index
      %c0_27 = arith.constant 0 : index
      %c0_28 = arith.constant 0 : index
      %102 = vector.load %arg7[%101, %c0_27, %c0_28] : memref<2x8x16xf32, #tpu.memory_space<vmem>>, vector<1x8x16xf32>
      %103 = vector.shape_cast %102 : vector<1x8x16xf32> to vector<8x16xf32>
      %104 = vector.shape_cast %100 : vector<8x16xf32> to vector<1x8x16xf32>
      tpu.vector_store %arg7[%101, %c0_27, %c0_28], %104 {strides = array<i32>} : memref<2x8x16xf32, #tpu.memory_space<vmem>>, vector<1x8x16xf32>,
    }
    %c2_i32_8 = arith.constant 2 : i32
    return
  }
  func.func @transform_0(%arg0: i32) -> (i32, i32, i32) {
    %c0_i32 = arith.constant 0 : i32
    %c0_i32_0 = arith.constant 0 : i32
    %c0_i32_1 = arith.constant 0 : i32
    return %arg0, %c0_i32, %c0_i32_0 : i32, i32, i32
  }
  func.func @transform_1(%arg0: i32) -> (i32, i32) {
    %c0_i32 = arith.constant 0 : i32
    %c0_i32_0 = arith.constant 0 : i32
    %c0_i32_1 = arith.constant 0 : i32
    return %c0_i32, %c0_i32_0 : i32, i32
  }
  func.func @transform_2(%arg0: i32) -> (i32, i32) {
    %c0_i32 = arith.constant 0 : i32
    %c0_i32_0 = arith.constant 0 : i32
    %c0_i32_1 = arith.constant 0 : i32
    return %c0_i32, %c0_i32_0 : i32, i32
  }
  func.func @transform_3(%arg0: i32) -> (i32, i32) {
    %c0_i32 = arith.constant 0 : i32
    %c0_i32_0 = arith.constant 0 : i32
    %c0_i32_1 = arith.constant 0 : i32
    return %c0_i32, %c0_i32_0 : i32, i32
  }
  func.func @transform_4(%arg0: i32) -> (i32, i32) {
    %c0_i32 = arith.constant 0 : i32
    %c0_i32_0 = arith.constant 0 : i32
    %c0_i32_1 = arith.constant 0 : i32
    return %c0_i32, %c0_i32_0 : i32, i32
  }
  func.func @transform_5(%arg0: i32) -> i32 {
    %c0_i32 = arith.constant 0 : i32
    %c0_i32_0 = arith.constant 0 : i32
    return %c0_i32 : i32
  }
  func.func @transform_6(%arg0: i32) -> (i32, i32, i32) {
    %c0_i32 = arith.constant 0 : i32
    %c0_i32_0 = arith.constant 0 : i32
    %c0_i32_1 = arith.constant 0 : i32
    return %arg0, %c0_i32, %c0_i32_0 : i32, i32, i32
  }
}

</mosaic_0001>

<llo_original>
// kernel: tpu_custom_call.1
$region0: #{tpu_custom_call.1}
  #allocation0 [shape = 'u32[]', space=smem, size = 0x4, offset = 0x4, fixed_abs, tag = 'smem constant byte address 0x4 - core index']
  #allocation1 [shape = 'u32[72,128]{1,0:T(1,128)}', space=vmem, size = 0x9000, scoped, tag = 'internal scratch']
  %s0 = inlined_call_operand.vmem [shape: f32[4,8,16], index: 0, kind: input, shape index: {}]
  %s1 = inlined_call_operand.vmem [shape: f32[16,8], index: 1, kind: input, shape index: {}]
  %s2 = inlined_call_operand.vmem [shape: f32[16,3], index: 2, kind: input, shape index: {}]
  %s3 = inlined_call_operand.vmem [shape: f32[8,16], index: 3, kind: input, shape index: {}]
  %s4 = inlined_call_operand.vmem [shape: f32[16,8], index: 4, kind: input, shape index: {}]
  %s5 = inlined_call_operand.vmem [shape: f32[2], index: 5, kind: input, shape index: {}]
  %s6 = inlined_call_operand.hbm [shape: f32[4,8,16], index: 6, kind: output, shape index: {}]
  %s7 = sld [smem:[#allocation0]]
  $region68: #{tpu_custom_call.1} parent=0
    _
  %s9 = ssub.s32 1, %s7
  %s10 = scalar_select 0, %s9, %s7
  $region1: #{tpu_custom_call.1} parent=0
    #allocation2 [shape = 'u8[512]{0}', space=smem, size = 0x200, scoped, tag = 'input window, operand 5, single buffered']
    #allocation3 [shape = 's32[2]{0}', space=sflag, size = 0x8, scoped, tag = 'scoped memory for tpu_custom_call.1']
    #allocation4 [shape = 's32[2]{0}', space=sflag, size = 0x8, scoped, tag = 'scoped memory for tpu_custom_call.1']
    #allocation5 [shape = 'u8[16384]{0}', space=vmem, size = 0x4000, scoped, tag = 'output window, operand 0']
    %11 = vsyncpa [#allocation4], 0
    %12 = vsyncpa [#allocation3], 0
    %s13 = scalar_lea.sflag [#allocation3], 1
    %14 = vsyncpa %s13, 0
    loop: start=0, step=1, limit=4
    $region2: #{tpu_custom_call.1} parent=1 // loop_pre_header
      _
    $region3: #{tpu_custom_call.1} parent=1 // loop_header
      %s16 = sphi 0, %s20
      %p17 = scmp.ge.s32.totalorder %s16, 4
      %s26 = sphi 0, %s28
      %s29 = sphi 0, %s26
      %s30 = sphi 0, %s29
      %s46 = sphi 0, %s30
      %s50 = sphi 0, %s50
      %s52 = sphi 0, %s50
      %s53 = sphi 0, %s52
      %s67 = sphi 0, %s53
      %s71 = sphi 0, %s71
      %s73 = sphi 0, %s71
      %s74 = sphi 0, %s73
      %s88 = sphi 0, %s74
      %s92 = sphi 0, %s92
      %s94 = sphi 0, %s92
      %s95 = sphi 0, %s94
      %s109 = sphi 0, %s95
      %s113 = sphi 0, %s113
      %s115 = sphi 0, %s113
      %s116 = sphi 0, %s115
      %s130 = sphi 0, %s116
      %s134 = sphi 0, %s134
      %s136 = sphi 0, %s134
      %s137 = sphi 0, %s136
      %s151 = sphi 0, %s137
      %s157 = sphi 0, %s159
      %s160 = sphi 0, %s157
      %s161 = sphi 0, %s160
      %s177 = sphi 0, %s161
    $region4: #{tpu_custom_call.1} parent=1 // loop_header_branch
      %19 = sbr.rel (%p17) target = $region8
    $region5: #{tpu_custom_call.1} parent=1 // loop_body
      %s21 = ssub.s32 %s16, 1
      %s22 = ssub.s32 %s16, 2
      %s23 = sadd.s32 %s16, 1
      %s24 = ssub.s32 %s16, %s23
      %p25 = scmp.eq.s32.totalorder %s24, 0
      %s27 = sadd.s32 %s26, 1
      %s28 = scalar_select %p25, %s26, %s27
      %p31 = pneg %p25
      %p32 = scmp.eq.s32.totalorder %s16, 1
      %p33 = por %p31, %p32
      %p34 = scmp.ne.s32.totalorder %s26, %s29
      %p35 = scmp.eq.s32.totalorder %s16, 0
      %p36 = por %p34, %p35
      %p37 = scmp.ne.s32.totalorder %s26, %s29
      %p38 = scmp.eq.s32.totalorder %s21, 1
      %p39 = por %p37, %p38
      %p40 = scmp.ne.s32.totalorder %s29, %s30
      %p41 = scmp.eq.s32.totalorder %s21, 0
      %p42 = por %p40, %p41
      %p43 = scmp.ne.s32.totalorder %s29, %s30
      %p44 = scmp.eq.s32.totalorder %s22, 1
      %p45 = por %p43, %p44
      %p47 = scmp.ne.s32.totalorder %s30, %s46
      %p48 = scmp.eq.s32.totalorder %s22, 0
      %p49 = por %p47, %p48
      %s51 = sadd.s32 %s50, 1
      %p54 = scmp.eq.s32.totalorder %s16, 1
      %p55 = scmp.ne.s32.totalorder %s50, %s52
      %p56 = scmp.eq.s32.totalorder %s16, 0
      %p57 = por %p55, %p56
      %p58 = scmp.ne.s32.totalorder %s50, %s52
      %p59 = scmp.eq.s32.totalorder %s21, 1
      %p60 = por %p58, %p59
      %p61 = scmp.ne.s32.totalorder %s52, %s53
      %p62 = scmp.eq.s32.totalorder %s21, 0
      %p63 = por %p61, %p62
      %p64 = scmp.ne.s32.totalorder %s52, %s53
      %p65 = scmp.eq.s32.totalorder %s22, 1
      %p66 = por %p64, %p65
      %p68 = scmp.ne.s32.totalorder %s53, %s67
      %p69 = scmp.eq.s32.totalorder %s22, 0
      %p70 = por %p68, %p69
      %s72 = sadd.s32 %s71, 1
      %p75 = scmp.eq.s32.totalorder %s16, 1
      %p76 = scmp.ne.s32.totalorder %s71, %s73
      %p77 = scmp.eq.s32.totalorder %s16, 0
      %p78 = por %p76, %p77
      %p79 = scmp.ne.s32.totalorder %s71, %s73
      %p80 = scmp.eq.s32.totalorder %s21, 1
      %p81 = por %p79, %p80
      %p82 = scmp.ne.s32.totalorder %s73, %s74
      %p83 = scmp.eq.s32.totalorder %s21, 0
      %p84 = por %p82, %p83
      %p85 = scmp.ne.s32.totalorder %s73, %s74
      %p86 = scmp.eq.s32.totalorder %s22, 1
      %p87 = por %p85, %p86
      %p89 = scmp.ne.s32.totalorder %s74, %s88
      %p90 = scmp.eq.s32.totalorder %s22, 0
      %p91 = por %p89, %p90
      %s93 = sadd.s32 %s92, 1
      %p96 = scmp.eq.s32.totalorder %s16, 1
      %p97 = scmp.ne.s32.totalorder %s92, %s94
      %p98 = scmp.eq.s32.totalorder %s16, 0
      %p99 = por %p97, %p98
      %p100 = scmp.ne.s32.totalorder %s92, %s94
      %p101 = scmp.eq.s32.totalorder %s21, 1
      %p102 = por %p100, %p101
      %p103 = scmp.ne.s32.totalorder %s94, %s95
      %p104 = scmp.eq.s32.totalorder %s21, 0
      %p105 = por %p103, %p104
      %p106 = scmp.ne.s32.totalorder %s94, %s95
      %p107 = scmp.eq.s32.totalorder %s22, 1
      %p108 = por %p106, %p107
      %p110 = scmp.ne.s32.totalorder %s95, %s109
      %p111 = scmp.eq.s32.totalorder %s22, 0
      %p112 = por %p110, %p111
      %s114 = sadd.s32 %s113, 1
      %p117 = scmp.eq.s32.totalorder %s16, 1
      %p118 = scmp.ne.s32.totalorder %s113, %s115
      %p119 = scmp.eq.s32.totalorder %s16, 0
      %p120 = por %p118, %p119
      %p121 = scmp.ne.s32.totalorder %s113, %s115
      %p122 = scmp.eq.s32.totalorder %s21, 1
      %p123 = por %p121, %p122
      %p124 = scmp.ne.s32.totalorder %s115, %s116
      %p125 = scmp.eq.s32.totalorder %s21, 0
      %p126 = por %p124, %p125
      %p127 = scmp.ne.s32.totalorder %s115, %s116
      %p128 = scmp.eq.s32.totalorder %s22, 1
      %p129 = por %p127, %p128
      %p131 = scmp.ne.s32.totalorder %s116, %s130
      %p132 = scmp.eq.s32.totalorder %s22, 0
      %p133 = por %p131, %p132
      %s135 = sadd.s32 %s134, 1
      %p138 = scmp.eq.s32.totalorder %s16, 1
      %p139 = scmp.ne.s32.totalorder %s134, %s136
      %p140 = scmp.eq.s32.totalorder %s16, 0
      %p141 = por %p139, %p140
      %p142 = scmp.ne.s32.totalorder %s134, %s136
      %p143 = scmp.eq.s32.totalorder %s21, 1
      %p144 = por %p142, %p143
      %p145 = scmp.ne.s32.totalorder %s136, %s137
      %p146 = scmp.eq.s32.totalorder %s21, 0
      %p147 = por %p145, %p146
      %p148 = scmp.ne.s32.totalorder %s136, %s137
      %p149 = scmp.eq.s32.totalorder %s22, 1
      %p150 = por %p148, %p149
      %p152 = scmp.ne.s32.totalorder %s137, %s151
      %p153 = scmp.eq.s32.totalorder %s22, 0
      %p154 = por %p152, %p153
      %s155 = ssub.s32 %s16, %s23
      %p156 = scmp.eq.s32.totalorder %s155, 0
      %s158 = sadd.s32 %s157, 1
      %s159 = scalar_select %p156, %s157, %s158
      %p162 = pneg %p156
      %p163 = scmp.eq.s32.totalorder %s16, 1
      %p164 = por %p162, %p163
      %p165 = scmp.ne.s32.totalorder %s157, %s160
      %p166 = scmp.eq.s32.totalorder %s16, 0
      %p167 = por %p165, %p166
      %p168 = scmp.ne.s32.totalorder %s157, %s160
      %p169 = scmp.eq.s32.totalorder %s21, 1
      %p170 = por %p168, %p169
      %p171 = scmp.ne.s32.totalorder %s160, %s161
      %p172 = scmp.eq.s32.totalorder %s21, 0
      %p173 = por %p171, %p172
      %p174 = scmp.ne.s32.totalorder %s160, %s161
      %p175 = scmp.eq.s32.totalorder %s22, 1
      %p176 = por %p174, %p175
      %p178 = scmp.ne.s32.totalorder %s161, %s177
      %p179 = scmp.eq.s32.totalorder %s22, 0
      %p180 = por %p178, %p179
      %p181 = scmp.le.s32.totalorder 1, %s16
      %p182 = scmp.lt.s32.totalorder %s16, 3
      %p183 = pnand %p181, %p182
      %p184 = pneg %p183
      // Predicated region
      $region9: #{tpu_custom_call.1} parent=5 // pred_check
        _
      $region10: #{tpu_custom_call.1} parent=5 // pred_check_branch
        %186 = sbr.rel (%p183) target = $region12
      $region11: #{tpu_custom_call.1} parent=5 // pred_region
        %s187 = ssub.s32 %s16, 1
        // Predicated region
        $region13: #{tpu_custom_call.1} parent=11 // pred_check
          %p188 = pneg %p63
        $region14: #{tpu_custom_call.1} parent=11 // pred_check_branch
          %190 = sbr.rel (%p188) target = $region16
        $region15: #{tpu_custom_call.1} parent=11 // pred_region
          _
        $region16: #{tpu_custom_call.1} parent=11 // pred_fallthru
          _
        // Predicated region
        $region17: #{tpu_custom_call.1} parent=11 // pred_check
          %p191 = pneg %p84
        $region18: #{tpu_custom_call.1} parent=11 // pred_check_branch
          %193 = sbr.rel (%p191) target = $region20
        $region19: #{tpu_custom_call.1} parent=11 // pred_region
          _
        $region20: #{tpu_custom_call.1} parent=11 // pred_fallthru
          _
        // Predicated region
        $region21: #{tpu_custom_call.1} parent=11 // pred_check
          %p194 = pneg %p105
        $region22: #{tpu_custom_call.1} parent=11 // pred_check_branch
          %196 = sbr.rel (%p194) target = $region24
        $region23: #{tpu_custom_call.1} parent=11 // pred_region
          _
        $region24: #{tpu_custom_call.1} parent=11 // pred_fallthru
          _
        // Predicated region
        $region25: #{tpu_custom_call.1} parent=11 // pred_check
          %p197 = pneg %p126
        $region26: #{tpu_custom_call.1} parent=11 // pred_check_branch
          %199 = sbr.rel (%p197) target = $region28
        $region27: #{tpu_custom_call.1} parent=11 // pred_region
          _
        $region28: #{tpu_custom_call.1} parent=11 // pred_fallthru
          _
        // Predicated region
        $region29: #{tpu_custom_call.1} parent=11 // pred_check
          %p200 = pneg %p147
        $region30: #{tpu_custom_call.1} parent=11 // pred_check_branch
          %202 = sbr.rel (%p200) target = $region32
        $region31: #{tpu_custom_call.1} parent=11 // pred_region
          %204 = vsyncadd [#allocation4], 0
          %s206 = sshll.u32 %s5, 4
          %s207 = int_to_ptr.vmem [resolvable:$true] %s206
          %209 = dma.vmem_to_smem %s207, 16, [#allocation2], [#allocation4]
        $region32: #{tpu_custom_call.1} parent=11 // pred_fallthru
          _
      $region12: #{tpu_custom_call.1} parent=5 // pred_fallthru
        _
      %p210 = scmp.lt.s32.totalorder %s16, 2
      // Predicated region
      $region33: #{tpu_custom_call.1} parent=5 // pred_check
        %p211 = pneg %p210
      $region34: #{tpu_custom_call.1} parent=5 // pred_check_branch
        %213 = sbr.rel (%p211) target = $region36
      $region35: #{tpu_custom_call.1} parent=5 // pred_region
        // Predicated region
        $region37: #{tpu_custom_call.1} parent=35 // pred_check
          %p214 = pneg %p36
        $region38: #{tpu_custom_call.1} parent=35 // pred_check_branch
          %216 = sbr.rel (%p214) target = $region40
        $region39: #{tpu_custom_call.1} parent=35 // pred_region
          %s217 = smul.u32 2, %s16
          %p218 = scmp.lt.s32.totalorder %s217, 3
          %s219 = scalar_select %p218, %s217, 3
          %s220 = smul.addr %s219, 8
          %s221 = scalar_lea.vmem %s0, %s220
          %s222 = smul.u32 2, %s16
        $region40: #{tpu_custom_call.1} parent=35 // pred_fallthru
          _
      $region36: #{tpu_custom_call.1} parent=5 // pred_fallthru
        _
      %p223 = scmp.le.s32.totalorder 1, %s16
      %p224 = scmp.lt.s32.totalorder %s16, 3
      %p225 = pnand %p223, %p224
      %p226 = pneg %p225
      // Predicated region
      $region41: #{tpu_custom_call.1} parent=5 // pred_check
        _
      $region42: #{tpu_custom_call.1} parent=5 // pred_check_branch
        %228 = sbr.rel (%p225) target = $region44
      $region43: #{tpu_custom_call.1} parent=5 // pred_region
        %s229 = ssub.s32 %s16, 1
        // Predicated region
        $region45: #{tpu_custom_call.1} parent=43 // pred_check
          %p230 = pneg %p147
        $region46: #{tpu_custom_call.1} parent=43 // pred_check_branch
          %232 = sbr.rel (%p230) target = $region48
        $region47: #{tpu_custom_call.1} parent=43 // pred_region
          %234 = dma.done [#allocation4], 16
        $region48: #{tpu_custom_call.1} parent=43 // pred_fallthru
          _
        %235 = sfence
        %s236 = smul.u32 2, %s21
        %p237 = scmp.lt.s32.totalorder %s236, 3
        %s238 = scalar_select %p237, %s236, 3
        %s239 = smul.addr %s238, 8
        %s240 = scalar_lea.vmem %s0, %s239
        %p241 = pneg %p42
        %p242 = pneg %p39
        %p243 = pneg %p63
        %p244 = pneg %p60
        %p245 = pneg %p84
        %p246 = pneg %p81
        %p247 = pneg %p105
        %p248 = pneg %p102
        %p249 = pneg %p126
        %p250 = pneg %p123
        %p251 = pneg %p147
        %p252 = pneg %p144
        %p253 = pneg %p173
        %p254 = pneg %p170
        %s255 = sand.u32 %s160, 1
        %s256 = scalar_lea.sflag [#allocation3], %s255
        %s257 = sand.u32 %s160, 1
        %s258 = smul.addr %s257, 16
        %s259 = scalar_lea.vmem [#allocation5], %s258
        %s260 = smul.u32 2, %s21
        %p261 = scmp.lt.s32.totalorder %s260, 3
        %s262 = scalar_select %p261, %s260, 3
        %s263 = smul.addr %s262, 8
        %s264 = scalar_lea.vmem %s0, %s263
        %s265 = smul.u32 2, %s21
        %s266 = smul.u32 2, %s21
        %v267 = vld [vmem:[%s4] sm:$0xff]
        %v268 = vld [vmem:[%s4 + $0x8] sm:$0xff]
        %s269 = sld [smem:[#allocation2]]
        %s270 = sld [smem:[#allocation2 + $0x1]]
        %v271 = vld [vmem:[%s1] sm:$0xff]
        %v272 = vld [vmem:[%s1 + $0x8] sm:$0xff]
        %v273 = vld [vmem:[%s3] sm:$0xff]
        %v274 = vld [vmem:[%s2] sm:$0xff]
        %v275 = vld [vmem:[%s2 + $0x8] sm:$0xff]
        loop: start=0, step=1, limit=2
        $region49: #{tpu_custom_call.1} parent=43 // loop_pre_header
          _
        $region50: #{tpu_custom_call.1} parent=43 // loop_header
          %s277 = sphi 0, %s281
          %p278 = scmp.ge.s32.totalorder %s277, 2
        $region51: #{tpu_custom_call.1} parent=43 // loop_header_branch
          %280 = sbr.rel (%p278) target = $region55
        $region52: #{tpu_custom_call.1} parent=43 // loop_body
          %s282 = smul.u32 %s277, 8
          %s283 = scalar_lea.vmem %s264, %s282
          %v284 = vld [vmem:[%s283] sm:$0xff]
          %286 = vset.pattern.permute.xlu0 0
          %287 = vperm.xlu0 %286, %v267
          %v288 = vpop.permute.xlu0 %287
          %291 = vset.pattern.permute.xlu0 0
          %292 = vperm.xlu0 %291, %v268
          %v293 = vpop.permute.xlu0 %292
          %vm295 = vcmask 64512
          %v297 = vsel %vm295, %v271, 0
          %v300 = vsel %vm295, %v272, 0
          %302 = vmatpush.msra.mxu0 0.0
          %303 = vmatpush.msra.mxu0 0.0
          %304 = vmatpush.msra.mxu0 0.0
          %305 = vmatpush.msra.mxu0 0.0
          %306 = vmatpush.msra.mxu0 0.0
          %307 = vmatpush.msra.mxu0 0.0
          %308 = vmatpush.msra.mxu0 0.0
          %309 = vmatpush.msra.mxu0 0.0
          %310 = vmatpush.msra.mxu0 0.0
          %311 = vmatpush.msra.mxu0 0.0
          %312 = vmatpush.msra.mxu0 0.0
          %313 = vmatpush.msra.mxu0 0.0
          %314 = vmatpush.msra.mxu0 0.0
          %315 = vmatpush.msra.mxu0 0.0
          %316 = vmatpush.msra.mxu0 0.0
          %317 = vmatpush.msra.mxu0 %v284
          %318 = vmatmul.f32.gmra.mxu0 %v297
          %v319 = vpop.f32.mrf.mxu0
          %v320 = vadd.f32 %v288, %v319
          %321 = vmatmul.f32.gmra.mxu0 %v300
          %v322 = vpop.f32.mrf.mxu0
          %v323 = vadd.f32 %v293, %v322
          %324 = vdwg.mxu0
          %vm325 = vcmp.ge.f32.partialorder %v320, 0.0
          %vm326 = vcmp.ge.f32.partialorder %v323, 0.0
          %v327 = vstv %s269
          %v328 = vmul.f32 %v327, %v320
          %v329 = vmul.f32 %v327, %v323
          %v330 = vsel %vm325, %v320, %v328
          %v331 = vsel %vm326, %v323, %v329
          %vm332 = vcmask 130048
          %v333 = vsel %vm332, %v330, 0.0
          %v334 = vsel %vm332, %v331, 0.0
          %v335 = vadd.f32 %v333, %v334
          %336 = vadd.xlane.f32.xlu0 %v335
          %v337 = vpop.xlane.xlu0 %336
          %v338 = vrot.slane %v337, 4
          %v339 = vadd.f32 %v337, %v338
          %v340 = vrot.slane %v339, 2
          %v341 = vadd.f32 %v339, %v340
          %v342 = vrot.slane %v341, 1
          %v343 = vadd.f32 %v341, %v342
          %s344 = vtos %v343
          %v345 = vmul.f32 %v330, %v330
          %v346 = vmul.f32 %v331, %v331
          %v347 = vsel %vm332, %v345, 0.0
          %v348 = vsel %vm332, %v346, 0.0
          %v349 = vadd.f32 %v347, %v348
          %350 = vadd.xlane.f32.xlu0 %v349
          %v351 = vpop.xlane.xlu0 %350
          %v352 = vrot.slane %v351, 4
          %v353 = vadd.f32 %v351, %v352
          %v354 = vrot.slane %v353, 2
          %v355 = vadd.f32 %v353, %v354
          %v356 = vrot.slane %v355, 1
          %v357 = vadd.f32 %v355, %v356
          %s358 = vtos %v357
          %s359 = smul.f32 %s344, 0.00390625
          %s360 = smul.f32 %s358, 0.00390625
          %s361 = smul.f32 %s359, %s359
          %s362 = ssub.f32 %s360, %s361
          %s363 = smax.f32 %s362, 0.0
          %s364 = sadd.f32 %s363, 1e-06
          %v365 = vstv %s364
          %v366 = vrsqrt.pop %v365
          %v367 = vmul.f32 %v366, %v365
          %v368 = vmul.f32 %v367, %v366
          %v369 = vmul.f32 0.5, %v368
          %v370 = vsub.f32 1.5, %v369
          %v371 = vmul.f32 %v366, %v370
          %vm372 = vweird.f32 %v365
          %vm373 = vweird.f32 %v366
          %vm374 = vmor %vm372, %vm373
          %v375 = vsel %vm374, %v366, %v371
          %s376 = vtos %v375
          %v377 = vstv %s376
          %v378 = vmul.f32 %v267, %v377
          %v379 = vmul.f32 %v268, %v377
          %v380 = vstv %s359
          %v381 = vmul.f32 %v380, %v378
          %v382 = vmul.f32 %v380, %v379
          %385 = vrot.lane.b32.xlu0 %v381, 1
          %v386 = vpop.permute.xlu0 %385
          %387 = vrot.lane.b32.xlu0 %v382, 1
          %v388 = vpop.permute.xlu0 %387
          %v391 = vsub.f32 %v267, %v386
          %v392 = vsub.f32 %v268, %v388
          %394 = vset.pattern.permute.xlu0 1
          %395 = vperm.xlu0 %394, %v378
          %v396 = vpop.permute.xlu0 %395
          %399 = vset.pattern.permute.xlu0 1
          %400 = vperm.xlu0 %399, %v379
          %v401 = vpop.permute.xlu0 %400
          %v403 = vmul.f32 %v330, %v396
          %v404 = vmul.f32 %v331, %v401
          %406 = vset.pattern.permute.xlu0 2
          %407 = vperm.xlu0 %406, %v391
          %v408 = vpop.permute.xlu0 %407
          %411 = vset.pattern.permute.xlu0 2
          %412 = vperm.xlu0 %411, %v392
          %v413 = vpop.permute.xlu0 %412
          %v415 = vadd.f32 %v403, %v408
          %v416 = vadd.f32 %v404, %v413
          %419 = vrot.lane.b32.xlu0 %v415, 2
          %v420 = vpop.permute.xlu0 %419
          %421 = vrot.lane.b32.xlu0 %v416, 2
          %v422 = vpop.permute.xlu0 %421
          %vm425 = vcmask 15360
          %v426 = vsel %vm425, 0.0, %v420
          %v427 = vsel %vm425, 0.0, %v422
          %vm428 = vcmask 146432
          %v429 = vsel %vm428, %v426, 0.0
          %v430 = vsel %vm428, %v427, 0.0
          %432 = vset.pattern.permute.xlu0 0
          %433 = vperm.xlu0 %432, %v274
          %v434 = vpop.permute.xlu0 %433
          %437 = vset.pattern.permute.xlu0 0
          %438 = vperm.xlu0 %437, %v275
          %v439 = vpop.permute.xlu0 %438
          %v441 = vmul.f32 %v429, %v434
          %v442 = vmul.f32 %v430, %v439
          %443 = vset.pattern.permute.xlu0 3
          %444 = vperm.xlu0 %443, %v267
          %v445 = vpop.permute.xlu0 %444
          %447 = vset.pattern.permute.xlu0 3
          %448 = vperm.xlu0 %447, %v268
          %v449 = vpop.permute.xlu0 %448
          %v451 = vadd.f32 %v441, %v445
          %v452 = vadd.f32 %v442, %v449
          %453 = vset.pattern.permute.xlu0 1
          %454 = vperm.xlu0 %453, %v274
          %v455 = vpop.permute.xlu0 %454
          %457 = vset.pattern.permute.xlu0 1
          %458 = vperm.xlu0 %457, %v275
          %v459 = vpop.permute.xlu0 %458
          %v461 = vmul.f32 %v429, %v455
          %v462 = vmul.f32 %v430, %v459
          %465 = vrot.lane.b32.xlu0 %v461, 126
          %v466 = vpop.permute.xlu0 %465
          %467 = vrot.lane.b32.xlu0 %v462, 126
          %v468 = vpop.permute.xlu0 %467
          %v471 = vadd.f32 %v451, %v466
          %v472 = vadd.f32 %v452, %v468
          %473 = vset.pattern.permute.xlu0 2
          %474 = vperm.xlu0 %473, %v274
          %v475 = vpop.permute.xlu0 %474
          %477 = vset.pattern.permute.xlu0 2
          %478 = vperm.xlu0 %477, %v275
          %v479 = vpop.permute.xlu0 %478
          %v481 = vmul.f32 %v429, %v475
          %v482 = vmul.f32 %v430, %v479
          %485 = vrot.lane.b32.xlu0 %v481, 124
          %v486 = vpop.permute.xlu0 %485
          %487 = vrot.lane.b32.xlu0 %v482, 124
          %v488 = vpop.permute.xlu0 %487
          %v491 = vadd.f32 %v471, %v486
          %v492 = vadd.f32 %v472, %v488
          %vm493 = vcmp.ge.f32.partialorder %v491, 0.0
          %vm494 = vcmp.ge.f32.partialorder %v492, 0.0
          %v495 = vstv %s270
          %v496 = vmul.f32 %v495, %v491
          %v497 = vmul.f32 %v495, %v492
          %v498 = vsel %vm493, %v491, %v496
          %v499 = vsel %vm494, %v492, %v497
          %v500 = vsel %vm332, %v498, 0.0
          %v501 = vsel %vm332, %v499, 0.0
          %v502 = vadd.f32 %v500, %v501
          %503 = vadd.xlane.f32.xlu0 %v502
          %v504 = vpop.xlane.xlu0 %503
          %v505 = vrot.slane %v504, 4
          %v506 = vadd.f32 %v504, %v505
          %v507 = vrot.slane %v506, 2
          %v508 = vadd.f32 %v506, %v507
          %v509 = vrot.slane %v508, 1
          %v510 = vadd.f32 %v508, %v509
          %s511 = vtos %v510
          %v512 = vmul.f32 %v498, %v498
          %v513 = vmul.f32 %v499, %v499
          %v514 = vsel %vm332, %v512, 0.0
          %v515 = vsel %vm332, %v513, 0.0
          %v516 = vadd.f32 %v514, %v515
          %517 = vadd.xlane.f32.xlu0 %v516
          %v518 = vpop.xlane.xlu0 %517
          %v519 = vrot.slane %v518, 4
          %v520 = vadd.f32 %v518, %v519
          %v521 = vrot.slane %v520, 2
          %v522 = vadd.f32 %v520, %v521
          %v523 = vrot.slane %v522, 1
          %v524 = vadd.f32 %v522, %v523
          %s525 = vtos %v524
          %s526 = smul.f32 %s511, 0.00390625
          %s527 = smul.f32 %s525, 0.00390625
          %s528 = smul.f32 %s526, %s526
          %s529 = ssub.f32 %s527, %s528
          %s530 = smax.f32 %s529, 0.0
          %s531 = sadd.f32 %s530, 1e-06
          %v532 = vstv %s531
          %v533 = vrsqrt.pop %v532
          %v534 = vmul.f32 %v533, %v532
          %v535 = vmul.f32 %v534, %v533
          %v536 = vmul.f32 0.5, %v535
          %v537 = vsub.f32 1.5, %v536
          %v538 = vmul.f32 %v533, %v537
          %vm539 = vweird.f32 %v532
          %vm540 = vweird.f32 %v533
          %vm541 = vmor %vm539, %vm540
          %v542 = vsel %vm541, %v533, %v538
          %s543 = vtos %v542
          %v544 = vstv %s543
          %v545 = vmul.f32 %v267, %v544
          %v546 = vmul.f32 %v268, %v544
          %v547 = vstv %s526
          %v548 = vmul.f32 %v547, %v545
          %v549 = vmul.f32 %v547, %v546
          %552 = vrot.lane.b32.xlu0 %v548, 1
          %v553 = vpop.permute.xlu0 %552
          %554 = vrot.lane.b32.xlu0 %v549, 1
          %v555 = vpop.permute.xlu0 %554
          %v558 = vsub.f32 %v267, %v553
          %v559 = vsub.f32 %v268, %v555
          %561 = vset.pattern.permute.xlu0 4
          %562 = vperm.xlu0 %561, %v545
          %v563 = vpop.permute.xlu0 %562
          %566 = vset.pattern.permute.xlu0 4
          %567 = vperm.xlu0 %566, %v546
          %v568 = vpop.permute.xlu0 %567
          %v570 = vmul.f32 %v498, %v563
          %v571 = vmul.f32 %v499, %v568
          %573 = vset.pattern.permute.xlu0 5
          %574 = vperm.xlu0 %573, %v558
          %v575 = vpop.permute.xlu0 %574
          %578 = vset.pattern.permute.xlu0 5
          %579 = vperm.xlu0 %578, %v559
          %v580 = vpop.permute.xlu0 %579
          %v582 = vadd.f32 %v570, %v575
          %v583 = vadd.f32 %v571, %v580
          %584 = vset.pattern.permute.xlu0 6
          %585 = vperm.xlu0 %584, %v267
          %v586 = vpop.permute.xlu0 %585
          %v589 = vsel %vm332, %v273, 0
          %591 = vmatpush.msra.mxu0 0.0
          %592 = vmatpush.msra.mxu0 0.0
          %593 = vmatpush.msra.mxu0 0.0
          %594 = vmatpush.msra.mxu0 0.0
          %595 = vmatpush.msra.mxu0 0.0
          %596 = vmatpush.msra.mxu0 0.0
          %597 = vmatpush.msra.mxu0 0.0
          %598 = vmatpush.msra.mxu0 0.0
          %599 = vmatpush.msra.mxu0 0.0
          %600 = vmatpush.msra.mxu0 0.0
          %601 = vmatpush.msra.mxu0 0.0
          %602 = vmatpush.msra.mxu0 0.0
          %603 = vmatpush.msra.mxu0 0.0
          %604 = vmatpush.msra.mxu0 0.0
          %605 = vmatpush.msra.mxu0 %v583
          %606 = vmatpush.msra.mxu0 %v582
          %607 = vmatmul.f32.gmra.mxu0 %v589
          %v608 = vpop.f32.mrf.mxu0
          %v609 = vadd.f32 %v586, %v608
          %610 = vdwg.mxu0
          %s611 = scalar_lea.vmem %s259, %s282 [#allocation5]
          %612 = vst.msk [vmem:[%s611] sm:$0xff] %vm332, %v609
        $region53: #{tpu_custom_call.1} parent=43 // loop_footer
          %s281 = sadd.s32 1, %s277
        $region54: #{tpu_custom_call.1} parent=43 // loop_footer_branch
          %276 = sbr.rel target = $region50
        $region55: #{tpu_custom_call.1} parent=43 // loop_exit
          _
        %s613 = sand.u32 %s160, 1
        %s614 = scalar_lea.sflag [#allocation3], %s613
        %s615 = sand.u32 %s160, 1
        %s616 = smul.addr %s615, 16
        %s617 = scalar_lea.vmem [#allocation5], %s616
        // Predicated region
        $region56: #{tpu_custom_call.1} parent=43 // pred_check
          %p618 = pneg %p170
        $region57: #{tpu_custom_call.1} parent=43 // pred_check_branch
          %620 = sbr.rel (%p618) target = $region59
        $region58: #{tpu_custom_call.1} parent=43 // pred_region
          %s621 = smul.u32 2, %s21
          %623 = vsyncadd %s614, 0
          %s624 = smul.addr %s621, 8
          %s625 = scalar_lea.hbm %s6, %s624
          %s626 = sshll.u32 %s617, 4
          %s627 = int_to_ptr.vmem [resolvable:$true] %s626
          %s628 = sshll.u32 %s625, 4
          %s629 = int_to_ptr.hbm [resolvable:$true] %s628
          %634 = dma.vmem_to_hbm [thread:$0]  %s627, 256, %s629, %s614, 128, 128, 8
        $region59: #{tpu_custom_call.1} parent=43 // pred_fallthru
          _
      $region44: #{tpu_custom_call.1} parent=5 // pred_fallthru
        _
      %p635 = scmp.le.s32.totalorder 2, %s16
      // Predicated region
      $region60: #{tpu_custom_call.1} parent=5 // pred_check
        %p636 = pneg %p635
      $region61: #{tpu_custom_call.1} parent=5 // pred_check_branch
        %638 = sbr.rel (%p636) target = $region63
      $region62: #{tpu_custom_call.1} parent=5 // pred_region
        %s639 = ssub.s32 %s16, 2
        // Predicated region
        $region64: #{tpu_custom_call.1} parent=62 // pred_check
          %p640 = pneg %p176
        $region65: #{tpu_custom_call.1} parent=62 // pred_check_branch
          %642 = sbr.rel (%p640) target = $region67
        $region66: #{tpu_custom_call.1} parent=62 // pred_region
          %s643 = sand.u32 %s161, 1
          %s644 = scalar_lea.sflag [#allocation3], %s643
          %s645 = sand.u32 %s161, 1
          %s646 = smul.addr %s645, 16
          %s647 = scalar_lea.vmem [#allocation5], %s646
          %649 = dma.done %s644, 256
        $region67: #{tpu_custom_call.1} parent=62 // pred_fallthru
          _
      $region63: #{tpu_custom_call.1} parent=5 // pred_fallthru
        _
    $region6: #{tpu_custom_call.1} parent=1 // loop_footer
      %s20 = sadd.s32 1, %s16
    $region7: #{tpu_custom_call.1} parent=1 // loop_footer_branch
      %15 = sbr.rel target = $region3
    $region8: #{tpu_custom_call.1} parent=1 // loop_exit
      _
    %650 = vsyncpa [#allocation3], 1
    %s651 = scalar_lea.sflag [#allocation3], 1
    %652 = vsyncpa %s651, 1
    %653 = vsyncpa [#allocation4], 1
    %s654 = scalar_lea.sflag [#allocation4], 1
    %655 = vsyncpa %s654, 1

</llo_original>
